<compile_context>
chip_gen: v7x
topology: tpu7x:2x2x1
jax: 0.10.0
libtpu: 0.0.40
codegen_flags: <defaults>
</compile_context>

<pallas_src>
import math
from collections import namedtuple

import jax
import jax.numpy as jnp
from jax.experimental import pallas as pl
from jax.experimental.pallas import tpu as pltpu

NUM_LEVELS = 3
COMPRESSION_RATIO = 0.5
DECAY_FACTOR = 0.8
LN_EPS = 1e-5


def _round_up(v, m):
    return -(-v // m) * m


# ---------------------------------------------------------------------------
# kernel
# ---------------------------------------------------------------------------
def _ln_axis0(x, gamma, beta):
    """LayerNorm over the hidden (sublane) axis. One-pass mean / E[x^2]: the
    two cross-sublane reductions are independent (back-to-back XLU)."""
    mean = jnp.mean(x, axis=0, keepdims=True)
    mean_sq = jnp.mean(x * x, axis=0, keepdims=True)
    var = jnp.maximum(mean_sq - mean * mean, 0.0)
    return (x - mean) * jax.lax.rsqrt(var + LN_EPS) * gamma + beta


def _make_kernel(num_levels, thresholds, matmul_dtype, hidden, widths, fold_last):
    """Kernel args: (xin_ref, w_enc..., w_dec..., vec_ref, out_ref).

    xin_ref : (rows_pad, T) f32 — rows [0:hidden] = x (hidden-major, tokens on
              lanes), row `hidden` = importance, remaining rows zero pad.
    weights : enc level i -> (out_i, in_i); dec level i -> (in_i, out_i);
              matmul_dtype. The kernel computes W @ X.
    vec_ref : (hidden, ncols) f32 slab; columns are, in order, (b, gamma,
              beta) per encoder level, (b, gamma, beta) per decoder level,
              then (if fold_last) the constant decoder seed for the folded
              deepest level.
    """
    enc_levels = num_levels - 1 if fold_last else num_levels
    dec_levels = num_levels - 1 if fold_last else num_levels

    def kernel(xin_ref, *refs):
        out_ref = refs[-1]
        vec_ref = refs[-2]
        w_refs = refs[:-2]

        # ---- hoist all loads to the tile top ----
        xin = xin_ref[...]                          # (rows_pad, T) f32
        x = xin[0:hidden, :]                        # (hidden, T)
        imp = xin[hidden:hidden + 1, :]             # (1, T)
        vec = vec_ref[...]                          # (hidden, ncols) f32
        w_enc = [w_refs[i][...] for i in range(enc_levels)]
        w_dec = [w_refs[enc_levels + i][...] for i in range(dec_levels)]

        col = [0]

        def next_col(w):
            c = col[0]
            col[0] += 1
            return vec[0:w, c:c + 1]                # (w, 1)

        enc_b, enc_g, enc_be = [], [], []
        for i in range(enc_levels):
            w = widths[i][1]
            enc_b.append(next_col(w))
            enc_g.append(next_col(w))
            enc_be.append(next_col(w))
        dec_b, dec_g, dec_be = [], [], []
        for i in range(dec_levels):
            w = widths[i][0]
            dec_b.append(next_col(w))
            dec_g.append(next_col(w))
            dec_be.append(next_col(w))
        s_const = next_col(widths[num_levels - 1][0]) if fold_last else None

        # ---- level assignment ----
        # Faithful to the PyTorch loop: level 0 is never actually assigned
        # (writing 0 into a zero-initialised tensor is a no-op) and the
        # deepest level is the fall-through, so only boolean masks for levels
        # 1 .. num_levels-2 are needed (a single compare for num_levels=3).
        merge_mask = {}
        assigned = None
        for lvl in range(1, num_levels - 1):
            m = imp >= thresholds[lvl]
            if assigned is None:
                assigned = m
            else:
                m = m & jnp.logical_not(assigned)
                assigned = assigned | m
            merge_mask[lvl] = m                     # (1, T) bool

        # ---- shared encoder chain (run once per tile) ----
        enc_out = []
        t = x
        for i in range(enc_levels):
            t = jnp.dot(w_enc[i], t.astype(matmul_dtype),
                        preferred_element_type=jnp.float32) + enc_b[i]
            t = _ln_axis0(t, enc_g[i], enc_be[i])
            t = jnp.maximum(t, 0.0)                 # ReLU
            enc_out.append(t)                       # (out_i, T)

        # ---- decoder walk, deepest first; merge each level's encoder output
        #      into the stream right before its matching decoder ----
        if fold_last:
            s = s_const                             # (in_last, 1), broadcasts
            start = num_levels - 2
        else:
            s = enc_out[num_levels - 1]
            start = num_levels - 1
        for lvl in range(start, -1, -1):
            if 1 <= lvl <= num_levels - 2:
                s = jnp.where(merge_mask[lvl], enc_out[lvl], s)
            s = jnp.dot(w_dec[lvl], s.astype(matmul_dtype),
                        preferred_element_type=jnp.float32) + dec_b[lvl]
            s = _ln_axis0(s, dec_g[lvl], dec_be[lvl])

        out_ref[...] = x + s                        # residual

    return kernel


# ---------------------------------------------------------------------------
# parameters
# ---------------------------------------------------------------------------
def init_params(key, hidden_size,
                compression_ratio=COMPRESSION_RATIO,
                num_levels=NUM_LEVELS,
                decay_factor=DECAY_FACTOR):
    """Deterministic synthetic init (xavier_normal_ for Linear weights, zeros
    for Linear biases, ones/zeros for LayerNorm affine). Flat list of 8 f32
    arrays per level (the layout the pure-JAX reference consumes)."""
    params = []
    current = hidden_size
    ratio = compression_ratio
    for _ in range(num_levels):
        out = max(int(current * ratio), 1)
        key, k_enc, k_dec = jax.random.split(key, 3)
        std = math.sqrt(2.0 / (current + out))      # xavier_normal_, gain=1
        w_enc = jax.random.normal(k_enc, (current, out), jnp.float32) * std
        b_enc = jnp.zeros((1, out), jnp.float32)
        g_enc = jnp.ones((1, out), jnp.float32)
        be_enc = jnp.zeros((1, out), jnp.float32)
        w_dec = jax.random.normal(k_dec, (out, current), jnp.float32) * std
        b_dec = jnp.zeros((1, current), jnp.float32)
        g_dec = jnp.ones((1, current), jnp.float32)
        be_dec = jnp.zeros((1, current), jnp.float32)
        params += [w_enc, b_enc, g_enc, be_enc,
                   w_dec, b_dec, g_dec, be_dec]
        current = out
        ratio *= decay_factor
    return params


Prepared = namedtuple(
    "Prepared",
    ["num_levels", "matmul_dtype", "hidden", "widths", "fold_last",
     "weights", "vec_slab"])


def prepare_params(params, hidden_size, num_levels=NUM_LEVELS,
                   matmul_dtype=jnp.bfloat16):
    """One-time conversion of the flat parameter list into the kernel layout
    (transpose + dtype cast + vector-slab packing + constant folding of the
    degenerate width-1 deepest level). Cache and reuse across calls."""
    widths = []
    for i in range(num_levels):
        w_e = params[8 * i]                         # (in_i, out_i)
        widths.append((int(w_e.shape[0]), int(w_e.shape[1])))
    assert widths[0][0] == hidden_size
    fold_last = num_levels >= 2 and widths[-1][1] == 1

    enc_levels = num_levels - 1 if fold_last else num_levels
    dec_levels = num_levels - 1 if fold_last else num_levels

    weights = []
    for i in range(enc_levels):                     # (out_i, in_i)
        weights.append(jnp.transpose(params[8 * i]).astype(matmul_dtype))
    for i in range(dec_levels):                     # (in_i, out_i)
        weights.append(jnp.transpose(params[8 * i + 4]).astype(matmul_dtype))

    def as_col(v, length):
        v = jnp.asarray(v, jnp.float32).reshape(-1)[:length]
        return jnp.pad(v, (0, hidden_size - length)).reshape(hidden_size, 1)

    cols = []
    for i in range(enc_levels):
        w = widths[i][1]
        cols += [as_col(params[8 * i + 1], w), as_col(params[8 * i + 2], w),
                 as_col(params[8 * i + 3], w)]
    for i in range(dec_levels):
        w = widths[i][0]
        cols += [as_col(params[8 * i + 5], w), as_col(params[8 * i + 6], w),
                 as_col(params[8 * i + 7], w)]
    if fold_last:
        # LN over width 1 is exactly beta; the folded level's encoder output
        # and first decoder stage are token-independent constants.
        i = num_levels - 1
        _, _, _, be_e, w_d, b_d, g_d, be_d = params[8 * i:8 * i + 8]
        enc_c = jnp.maximum(be_e, 0.0)              # ReLU(LN(width 1)) == ReLU(beta)
        lin = jnp.dot(enc_c.astype(matmul_dtype), w_d.astype(matmul_dtype),
                      preferred_element_type=jnp.float32) + b_d
        mean = jnp.mean(lin, axis=-1, keepdims=True)
        var = jnp.mean((lin - mean) ** 2, axis=-1, keepdims=True)
        s_const = (lin - mean) * jax.lax.rsqrt(var + LN_EPS) * g_d + be_d
        cols.append(as_col(s_const, widths[i][0]))

    vec_slab = jnp.concatenate(cols, axis=1).astype(jnp.float32)

    return Prepared(num_levels, matmul_dtype, hidden_size, widths, fold_last,
                    weights, vec_slab)


# ---------------------------------------------------------------------------
# wrapper
# ---------------------------------------------------------------------------
def _tensorcores_per_chip():
    # v4 / v5p (megacore) and v7x have 2 TensorCores per chip that
    # dimension_semantics=("parallel",) can shard across; v5e / v6e have 1.
    try:
        kind = jax.devices()[0].device_kind.lower()
    except Exception:
        return 1
    return 2 if any(t in kind for t in ("v4", "v5p", "v7", "7x")) else 1


def _choose_lane_tile(tokens, max_tile, num_cores):
    """Big lane tiles amortise the ~0.35us/grid-step overhead; only balance /
    force-split the grid on 2-TensorCore chips, and only when each step still
    gets >= 128 lanes of real work."""
    lanes = _round_up(max(tokens, 1), 128)
    max_tile = max(128, _round_up(max_tile, 128))
    steps = -(-lanes // max_tile)
    if num_cores > 1:
        balanced = _round_up(steps, num_cores)
        if lanes >= balanced * 128:
            steps = balanced
    tile = _round_up(-(-lanes // steps), 128)
    steps = -(-lanes // tile)
    return tile, steps


def _vmem_bytes(shape, dtype):
    itemsize = jnp.dtype(dtype).itemsize
    sub = 8 * (4 // itemsize)                       # 8 rows f32, 16 rows bf16
    return _round_up(shape[0], sub) * _round_up(shape[1], 128) * itemsize


def _compress_tokens(x_tokens, imp_tokens, prep, thresholds, max_tile):
    """x_tokens: (N, hidden) f32, imp_tokens: (N,) f32 -> (N, hidden) f32."""
    tokens, hidden = x_tokens.shape
    assert hidden == prep.hidden

    # lane-dense relayout: hidden on sublanes, tokens on the 128-lane axis,
    # importance folded in as one extra row (rows padded to a multiple of 8).
    rows = _round_up(hidden + 1, 8)
    xt = jnp.transpose(x_tokens.astype(jnp.float32))             # (hidden, N)
    imp_row = imp_tokens.reshape(1, tokens).astype(jnp.float32)
    xin = jnp.concatenate(
        [xt, imp_row, jnp.zeros((rows - hidden - 1, tokens), jnp.float32)],
        axis=0)

    num_cores = _tensorcores_per_chip()
    tile, steps = _choose_lane_tile(tokens, max_tile, num_cores)
    total = tile * steps
    if total != tokens:
        xin = jnp.pad(xin, ((0, 0), (0, total - tokens)))

    kparams = list(prep.weights) + [prep.vec_slab]
    param_specs = [pl.BlockSpec(p.shape, lambda i: (0, 0)) for p in kparams]

    # explicit VMEM budget: double-buffered input/output tiles + params +
    # intermediate headroom, capped well under v7x's 64 MiB / TC.
    need = (2 * _vmem_bytes((rows, tile), jnp.float32)
            + 2 * _vmem_bytes((hidden, tile), jnp.float32)
            + 2 * sum(_vmem_bytes(p.shape, p.dtype) for p in kparams)
            + 6 * _vmem_bytes((hidden, tile), jnp.float32))
    vmem_limit = int(min(48 * 2 ** 20, max(16 * 2 ** 20, 2 * need)))

    kernel = _make_kernel(prep.num_levels,
                          tuple(float(t) for t in thresholds),
                          prep.matmul_dtype, hidden, prep.widths,
                          prep.fold_last)

    out = pl.pallas_call(
        kernel,
        out_shape=jax.ShapeDtypeStruct((hidden, total), jnp.float32),
        grid_spec=pltpu.PrefetchScalarGridSpec(
            num_scalar_prefetch=0,
            grid=(steps,),
            in_specs=[pl.BlockSpec((rows, tile), lambda i: (0, i))]
                     + param_specs,
            out_specs=pl.BlockSpec((hidden, tile), lambda i: (0, i)),
        ),
        compiler_params=pltpu.CompilerParams(
            dimension_semantics=("parallel",),
            vmem_limit_bytes=vmem_limit),
    )(xin, *kparams)

    return jnp.transpose(out[:, :tokens])                        # (N, hidden)


def pyramid_compress_kv(keys, values, importance, prep, thresholds,
                        max_tile=2048):
    """Fused keys+values compression (one pallas_call, stacked along tokens).
    keys/values: [B, S, H], importance: [B, S] or None -> (ck, cv)."""
    B, S, H = keys.shape
    if importance is None:
        importance = jnp.full((B, S), 0.5, jnp.float32)
    n = B * S
    x = jnp.concatenate([keys.reshape(n, H), values.reshape(n, H)], axis=0)
    imp = jnp.concatenate([importance.reshape(n), importance.reshape(n)])
    out = _compress_tokens(x, imp, prep, thresholds, max_tile)
    return out[:n].reshape(B, S, H), out[n:].reshape(B, S, H)


# ---------------------------------------------------------------------------
# pure-JAX reference (mirrors the PyTorch forward: dense per-level recompute,
# int level assignment, two-pass LayerNorm — deliberately structured
# differently from the shared-pyramid / constant-folded kernel)
# ---------------------------------------------------------------------------
def reference(x, importance, params, num_levels, thresholds,
              matmul_dtype=jnp.bfloat16):
    B, S, H = x.shape
    xf = x.reshape(-1, H).astype(jnp.float32)
    imp = importance.reshape(-1, 1).astype(jnp.float32)
    levels = jnp.zeros_like(imp, dtype=jnp.int32)
    for level in range(num_levels):
        if level == num_levels - 1:
            mask = levels == 0
        else:
            mask = (imp >= thresholds[level]) & (levels == 0)
        levels = jnp.where(mask, level, levels)

    def lin(t, w, b):
        return jnp.dot(t.astype(matmul_dtype), w.astype(matmul_dtype),
                       preferred_element_type=jnp.float32) + b

    def ln(t, g, b):
        mean = jnp.mean(t, axis=-1, keepdims=True)
        var = jnp.mean((t - mean) ** 2, axis=-1, keepdims=True)
        return (t - mean) * jax.lax.rsqrt(var + LN_EPS) * g + b

    out = jnp.zeros_like(xf)
    for level in range(num_levels):
        t = xf
        for i in range(level + 1):
            w, b, g, be = params[8 * i:8 * i + 4]
            t = jnp.maximum(ln(lin(t, w, b), g, be), 0.0)
        for i in range(level, -1, -1):
            w, b, g, be = params[8 * i + 4:8 * i + 8]
            t = ln(lin(t, w, b), g, be)
        t = xf + t
        out = jnp.where(levels == level, t, out)
    return out.reshape(B, S, H)


if __name__ == "__main__":
    # TODO(synk): the stateful compression-statistics buffers
    # (total_original_size / total_compressed_size / compression_count) are
    # host-side bookkeeping only and are not implemented in the kernel.
    B, S, H = 2, 8, 32
    key = jax.random.PRNGKey(0)
    kk, kv, ki, kp = jax.random.split(key, 4)

    keys_in = jax.random.normal(kk, (B, S, H), jnp.float32)
    values_in = jax.random.normal(kv, (B, S, H), jnp.float32)
    importance = jax.random.uniform(ki, (B, S), jnp.float32)

    params = init_params(kp, H)
    # torch.linspace(0.8, 0.2, num_levels)
    thresholds = [0.8 - (0.8 - 0.2) * i / (NUM_LEVELS - 1)
                  for i in range(NUM_LEVELS)]

    # ---- exact f32 mode: matches the PyTorch forward semantics tightly ----
    prep32 = prepare_params(params, H, NUM_LEVELS, matmul_dtype=jnp.float32)
    ck32, cv32 = pyramid_compress_kv(keys_in, values_in, importance, prep32,
                                     thresholds)
    jax.block_until_ready((ck32, cv32))
    ck32_ref = reference(keys_in, importance, params, NUM_LEVELS, thresholds,
                         matmul_dtype=jnp.float32)
    cv32_ref = reference(values_in, importance, params, NUM_LEVELS, thresholds,
                         matmul_dtype=jnp.float32)
    assert jnp.allclose(ck32, ck32_ref, atol=1e-4, rtol=1e-4), "keys mismatch (f32)"
    assert jnp.allclose(cv32, cv32_ref, atol=1e-4, rtol=1e-4), "values mismatch (f32)"

    # ---- default fast path: bf16 MXU matmuls, f32 accumulate / LayerNorm ----
    prep = prepare_params(params, H, NUM_LEVELS, matmul_dtype=jnp.bfloat16)
    ck, cv = pyramid_compress_kv(keys_in, values_in, importance, prep,
                                 thresholds)
    jax.block_until_ready((ck, cv))
    ck_ref = reference(keys_in, importance, params, NUM_LEVELS, thresholds)
    cv_ref = reference(values_in, importance, params, NUM_LEVELS, thresholds)
    assert jnp.allclose(ck, ck_ref, atol=1e-2, rtol=1e-2), "keys mismatch (bf16)"
    assert jnp.allclose(cv, cv_ref, atol=1e-2, rtol=1e-2), "values mismatch (bf16)"

    print("KERNEL_OK")
</pallas_src>

<mosaic_0001>
module attributes {stable_mosaic.version = 11 : i64} {
  func.func @kernel(%arg0: i32, %arg1: memref<40x128xf32, #tpu.memory_space<vmem>>, %arg2: memref<16x32xf32, #tpu.memory_space<vmem>>, %arg3: memref<6x16xf32, #tpu.memory_space<vmem>>, %arg4: memref<32x16xf32, #tpu.memory_space<vmem>>, %arg5: memref<16x6xf32, #tpu.memory_space<vmem>>, %arg6: memref<32x13xf32, #tpu.memory_space<vmem>>, %arg7: memref<32x128xf32, #tpu.memory_space<vmem>>) attributes {dimension_semantics = [#tpu.dimension_semantics<parallel>], iteration_bounds = array<i64: 1>, scalar_prefetch = 0 : i64, scratch_operands = 0 : i64, tpu.core_type = #tpu.core_type<tc>, window_params = [{transform_indices = @transform_0, window_bounds = array<i64: 40, 128>}, {pipeline_mode = #tpu.pipeline_mode<synchronous>, transform_indices = @transform_1, window_bounds = array<i64: 16, 32>}, {pipeline_mode = #tpu.pipeline_mode<synchronous>, transform_indices = @transform_2, window_bounds = array<i64: 6, 16>}, {pipeline_mode = #tpu.pipeline_mode<synchronous>, transform_indices = @transform_3, window_bounds = array<i64: 32, 16>}, {pipeline_mode = #tpu.pipeline_mode<synchronous>, transform_indices = @transform_4, window_bounds = array<i64: 16, 6>}, {pipeline_mode = #tpu.pipeline_mode<synchronous>, transform_indices = @transform_5, window_bounds = array<i64: 32, 13>}, {transform_indices = @transform_6, window_bounds = array<i64: 32, 128>}]} {
    %c0 = arith.constant 0 : index
    %c0_0 = arith.constant 0 : index
    %0 = vector.load %arg1[%c0, %c0_0] : memref<40x128xf32, #tpu.memory_space<vmem>>, vector<40x128xf32>
    %1 = vector.extract_strided_slice %0 {offsets = [0, 0], sizes = [32, 128], strides = [1, 1]} : vector<40x128xf32> to vector<32x128xf32>
    %2 = vector.extract_strided_slice %0 {offsets = [32, 0], sizes = [1, 128], strides = [1, 1]} : vector<40x128xf32> to vector<1x128xf32>
    %c0_1 = arith.constant 0 : index
    %c0_2 = arith.constant 0 : index
    %3 = vector.load %arg6[%c0_1, %c0_2] : memref<32x13xf32, #tpu.memory_space<vmem>>, vector<32x13xf32>
    %c0_3 = arith.constant 0 : index
    %c0_4 = arith.constant 0 : index
    %4 = vector.load %arg2[%c0_3, %c0_4] : memref<16x32xf32, #tpu.memory_space<vmem>>, vector<16x32xf32>
    %c0_5 = arith.constant 0 : index
    %c0_6 = arith.constant 0 : index
    %5 = vector.load %arg3[%c0_5, %c0_6] : memref<6x16xf32, #tpu.memory_space<vmem>>, vector<6x16xf32>
    %c0_7 = arith.constant 0 : index
    %c0_8 = arith.constant 0 : index
    %6 = vector.load %arg4[%c0_7, %c0_8] : memref<32x16xf32, #tpu.memory_space<vmem>>, vector<32x16xf32>
    %c0_9 = arith.constant 0 : index
    %c0_10 = arith.constant 0 : index
    %7 = vector.load %arg5[%c0_9, %c0_10] : memref<16x6xf32, #tpu.memory_space<vmem>>, vector<16x6xf32>
    %8 = vector.extract_strided_slice %3 {offsets = [0, 0], sizes = [16, 1], strides = [1, 1]} : vector<32x13xf32> to vector<16x1xf32>
    %9 = vector.extract_strided_slice %3 {offsets = [0, 1], sizes = [16, 1], strides = [1, 1]} : vector<32x13xf32> to vector<16x1xf32>
    %10 = vector.extract_strided_slice %3 {offsets = [0, 2], sizes = [16, 1], strides = [1, 1]} : vector<32x13xf32> to vector<16x1xf32>
    %11 = vector.extract_strided_slice %3 {offsets = [0, 3], sizes = [6, 1], strides = [1, 1]} : vector<32x13xf32> to vector<6x1xf32>
    %12 = vector.extract_strided_slice %3 {offsets = [0, 4], sizes = [6, 1], strides = [1, 1]} : vector<32x13xf32> to vector<6x1xf32>
    %13 = vector.extract_strided_slice %3 {offsets = [0, 5], sizes = [6, 1], strides = [1, 1]} : vector<32x13xf32> to vector<6x1xf32>
    %14 = vector.extract_strided_slice %3 {offsets = [0, 6], sizes = [32, 1], strides = [1, 1]} : vector<32x13xf32> to vector<32x1xf32>
    %15 = vector.extract_strided_slice %3 {offsets = [0, 7], sizes = [32, 1], strides = [1, 1]} : vector<32x13xf32> to vector<32x1xf32>
    %16 = vector.extract_strided_slice %3 {offsets = [0, 8], sizes = [32, 1], strides = [1, 1]} : vector<32x13xf32> to vector<32x1xf32>
    %17 = vector.extract_strided_slice %3 {offsets = [0, 9], sizes = [16, 1], strides = [1, 1]} : vector<32x13xf32> to vector<16x1xf32>
    %18 = vector.extract_strided_slice %3 {offsets = [0, 10], sizes = [16, 1], strides = [1, 1]} : vector<32x13xf32> to vector<16x1xf32>
    %19 = vector.extract_strided_slice %3 {offsets = [0, 11], sizes = [16, 1], strides = [1, 1]} : vector<32x13xf32> to vector<16x1xf32>
    %20 = vector.extract_strided_slice %3 {offsets = [0, 12], sizes = [6, 1], strides = [1, 1]} : vector<32x13xf32> to vector<6x1xf32>
    %cst = arith.constant 5.000000e-01 : f32
    %21 = vector.broadcast %cst : f32 to vector<1x128xf32>
    %22 = arith.cmpf oge, %2, %21 : vector<1x128xf32>
    %cst_11 = arith.constant dense<0.000000e+00> : vector<16x128xf32>
    %23 = tpu.matmul %4, %1, %cst_11 {dimension_numbers = #tpu.dot_dimension_numbers<[1], [0], [0], [1], [0, 0, 1, 1], [], []>} : vector<16x32xf32>, vector<32x128xf32>, vector<16x128xf32> -> vector<16x128xf32>
    %24 = vector.broadcast %8 : vector<16x1xf32> to vector<16x128xf32>
    %25 = arith.addf %23, %24 : vector<16x128xf32>
    %cst_12 = arith.constant dense<0.000000e+00> : vector<128xf32>
    %26 = vector.multi_reduction <add>, %25, %cst_12 [0] : vector<16x128xf32> to vector<128xf32>
    %27 = vector.shape_cast %26 : vector<128xf32> to vector<1x128xf32>
    %cst_13 = arith.constant 1.600000e+01 : f32
    %28 = vector.broadcast %cst_13 : f32 to vector<1x128xf32>
    %29 = arith.divf %27, %28 : vector<1x128xf32>
    %30 = arith.mulf %25, %25 : vector<16x128xf32>
    %cst_14 = arith.constant dense<0.000000e+00> : vector<128xf32>
    %31 = vector.multi_reduction <add>, %30, %cst_14 [0] : vector<16x128xf32> to vector<128xf32>
    %32 = vector.shape_cast %31 : vector<128xf32> to vector<1x128xf32>
    %cst_15 = arith.constant 1.600000e+01 : f32
    %33 = vector.broadcast %cst_15 : f32 to vector<1x128xf32>
    %34 = arith.divf %32, %33 : vector<1x128xf32>
    %35 = arith.mulf %29, %29 : vector<1x128xf32>
    %36 = arith.subf %34, %35 : vector<1x128xf32>
    %cst_16 = arith.constant 0.000000e+00 : f32
    %37 = vector.broadcast %cst_16 : f32 to vector<1x128xf32>
    %38 = arith.maximumf %36, %37 : vector<1x128xf32>
    %39 = vector.broadcast %29 : vector<1x128xf32> to vector<16x128xf32>
    %40 = arith.subf %25, %39 : vector<16x128xf32>
    %cst_17 = arith.constant 9.99999974E-6 : f32
    %41 = vector.broadcast %cst_17 : f32 to vector<1x128xf32>
    %42 = arith.addf %38, %41 : vector<1x128xf32>
    %43 = math.rsqrt %42 : vector<1x128xf32>
    %44 = vector.broadcast %43 : vector<1x128xf32> to vector<16x128xf32>
    %45 = arith.mulf %40, %44 : vector<16x128xf32>
    %46 = vector.broadcast %9 : vector<16x1xf32> to vector<16x128xf32>
    %47 = arith.mulf %45, %46 : vector<16x128xf32>
    %48 = vector.broadcast %10 : vector<16x1xf32> to vector<16x128xf32>
    %49 = arith.addf %47, %48 : vector<16x128xf32>
    %cst_18 = arith.constant 0.000000e+00 : f32
    %50 = vector.broadcast %cst_18 : f32 to vector<16x128xf32>
    %51 = arith.maximumf %49, %50 : vector<16x128xf32>
    %cst_19 = arith.constant dense<0.000000e+00> : vector<6x128xf32>
    %52 = tpu.matmul %5, %51, %cst_19 {dimension_numbers = #tpu.dot_dimension_numbers<[1], [0], [0], [1], [0, 0, 1, 1], [], []>} : vector<6x16xf32>, vector<16x128xf32>, vector<6x128xf32> -> vector<6x128xf32>
    %53 = vector.broadcast %11 : vector<6x1xf32> to vector<6x128xf32>
    %54 = arith.addf %52, %53 : vector<6x128xf32>
    %cst_20 = arith.constant dense<0.000000e+00> : vector<128xf32>
    %55 = vector.multi_reduction <add>, %54, %cst_20 [0] : vector<6x128xf32> to vector<128xf32>
    %56 = vector.shape_cast %55 : vector<128xf32> to vector<1x128xf32>
    %cst_21 = arith.constant 6.000000e+00 : f32
    %57 = vector.broadcast %cst_21 : f32 to vector<1x128xf32>
    %58 = arith.divf %56, %57 : vector<1x128xf32>
    %59 = arith.mulf %54, %54 : vector<6x128xf32>
    %cst_22 = arith.constant dense<0.000000e+00> : vector<128xf32>
    %60 = vector.multi_reduction <add>, %59, %cst_22 [0] : vector<6x128xf32> to vector<128xf32>
    %61 = vector.shape_cast %60 : vector<128xf32> to vector<1x128xf32>
    %cst_23 = arith.constant 6.000000e+00 : f32
    %62 = vector.broadcast %cst_23 : f32 to vector<1x128xf32>
    %63 = arith.divf %61, %62 : vector<1x128xf32>
    %64 = arith.mulf %58, %58 : vector<1x128xf32>
    %65 = arith.subf %63, %64 : vector<1x128xf32>
    %cst_24 = arith.constant 0.000000e+00 : f32
    %66 = vector.broadcast %cst_24 : f32 to vector<1x128xf32>
    %67 = arith.maximumf %65, %66 : vector<1x128xf32>
    %68 = vector.broadcast %58 : vector<1x128xf32> to vector<6x128xf32>
    %69 = arith.subf %54, %68 : vector<6x128xf32>
    %cst_25 = arith.constant 9.99999974E-6 : f32
    %70 = vector.broadcast %cst_25 : f32 to vector<1x128xf32>
    %71 = arith.addf %67, %70 : vector<1x128xf32>
    %72 = math.rsqrt %71 : vector<1x128xf32>
    %73 = vector.broadcast %72 : vector<1x128xf32> to vector<6x128xf32>
    %74 = arith.mulf %69, %73 : vector<6x128xf32>
    %75 = vector.broadcast %12 : vector<6x1xf32> to vector<6x128xf32>
    %76 = arith.mulf %74, %75 : vector<6x128xf32>
    %77 = vector.broadcast %13 : vector<6x1xf32> to vector<6x128xf32>
    %78 = arith.addf %76, %77 : vector<6x128xf32>
    %cst_26 = arith.constant 0.000000e+00 : f32
    %79 = vector.broadcast %cst_26 : f32 to vector<6x128xf32>
    %80 = arith.maximumf %78, %79 : vector<6x128xf32>
    %81 = vector.shape_cast %22 : vector<1x128xi1> to vector<1x128xi1>
    %82 = vector.broadcast %81 : vector<1x128xi1> to vector<6x128xi1>
    %83 = vector.shape_cast %20 : vector<6x1xf32> to vector<6x1xf32>
    %84 = vector.broadcast %83 : vector<6x1xf32> to vector<6x128xf32>
    %85 = arith.select %82, %80, %84 : vector<6x128xi1>, vector<6x128xf32>
    %cst_27 = arith.constant dense<0.000000e+00> : vector<16x128xf32>
    %86 = tpu.matmul %7, %85, %cst_27 {dimension_numbers = #tpu.dot_dimension_numbers<[1], [0], [0], [1], [0, 0, 1, 1], [], []>} : vector<16x6xf32>, vector<6x128xf32>, vector<16x128xf32> -> vector<16x128xf32>
    %87 = vector.broadcast %17 : vector<16x1xf32> to vector<16x128xf32>
    %88 = arith.addf %86, %87 : vector<16x128xf32>
    %cst_28 = arith.constant dense<0.000000e+00> : vector<128xf32>
    %89 = vector.multi_reduction <add>, %88, %cst_28 [0] : vector<16x128xf32> to vector<128xf32>
    %90 = vector.shape_cast %89 : vector<128xf32> to vector<1x128xf32>
    %cst_29 = arith.constant 1.600000e+01 : f32
    %91 = vector.broadcast %cst_29 : f32 to vector<1x128xf32>
    %92 = arith.divf %90, %91 : vector<1x128xf32>
    %93 = arith.mulf %88, %88 : vector<16x128xf32>
    %cst_30 = arith.constant dense<0.000000e+00> : vector<128xf32>
    %94 = vector.multi_reduction <add>, %93, %cst_30 [0] : vector<16x128xf32> to vector<128xf32>
    %95 = vector.shape_cast %94 : vector<128xf32> to vector<1x128xf32>
    %cst_31 = arith.constant 1.600000e+01 : f32
    %96 = vector.broadcast %cst_31 : f32 to vector<1x128xf32>
    %97 = arith.divf %95, %96 : vector<1x128xf32>
    %98 = arith.mulf %92, %92 : vector<1x128xf32>
    %99 = arith.subf %97, %98 : vector<1x128xf32>
    %cst_32 = arith.constant 0.000000e+00 : f32
    %100 = vector.broadcast %cst_32 : f32 to vector<1x128xf32>
    %101 = arith.maximumf %99, %100 : vector<1x128xf32>
    %102 = vector.broadcast %92 : vector<1x128xf32> to vector<16x128xf32>
    %103 = arith.subf %88, %102 : vector<16x128xf32>
    %cst_33 = arith.constant 9.99999974E-6 : f32
    %104 = vector.broadcast %cst_33 : f32 to vector<1x128xf32>
    %105 = arith.addf %101, %104 : vector<1x128xf32>
    %106 = math.rsqrt %105 : vector<1x128xf32>
    %107 = vector.broadcast %106 : vector<1x128xf32> to vector<16x128xf32>
    %108 = arith.mulf %103, %107 : vector<16x128xf32>
    %109 = vector.broadcast %18 : vector<16x1xf32> to vector<16x128xf32>
    %110 = arith.mulf %108, %109 : vector<16x128xf32>
    %111 = vector.broadcast %19 : vector<16x1xf32> to vector<16x128xf32>
    %112 = arith.addf %110, %111 : vector<16x128xf32>
    %cst_34 = arith.constant dense<0.000000e+00> : vector<32x128xf32>
    %113 = tpu.matmul %6, %112, %cst_34 {dimension_numbers = #tpu.dot_dimension_numbers<[1], [0], [0], [1], [0, 0, 1, 1], [], []>} : vector<32x16xf32>, vector<16x128xf32>, vector<32x128xf32> -> vector<32x128xf32>
    %114 = vector.broadcast %14 : vector<32x1xf32> to vector<32x128xf32>
    %115 = arith.addf %113, %114 : vector<32x128xf32>
    %cst_35 = arith.constant dense<0.000000e+00> : vector<128xf32>
    %116 = vector.multi_reduction <add>, %115, %cst_35 [0] : vector<32x128xf32> to vector<128xf32>
    %117 = vector.shape_cast %116 : vector<128xf32> to vector<1x128xf32>
    %cst_36 = arith.constant 3.200000e+01 : f32
    %118 = vector.broadcast %cst_36 : f32 to vector<1x128xf32>
    %119 = arith.divf %117, %118 : vector<1x128xf32>
    %120 = arith.mulf %115, %115 : vector<32x128xf32>
    %cst_37 = arith.constant dense<0.000000e+00> : vector<128xf32>
    %121 = vector.multi_reduction <add>, %120, %cst_37 [0] : vector<32x128xf32> to vector<128xf32>
    %122 = vector.shape_cast %121 : vector<128xf32> to vector<1x128xf32>
    %cst_38 = arith.constant 3.200000e+01 : f32
    %123 = vector.broadcast %cst_38 : f32 to vector<1x128xf32>
    %124 = arith.divf %122, %123 : vector<1x128xf32>
    %125 = arith.mulf %119, %119 : vector<1x128xf32>
    %126 = arith.subf %124, %125 : vector<1x128xf32>
    %cst_39 = arith.constant 0.000000e+00 : f32
    %127 = vector.broadcast %cst_39 : f32 to vector<1x128xf32>
    %128 = arith.maximumf %126, %127 : vector<1x128xf32>
    %129 = vector.broadcast %119 : vector<1x128xf32> to vector<32x128xf32>
    %130 = arith.subf %115, %129 : vector<32x128xf32>
    %cst_40 = arith.constant 9.99999974E-6 : f32
    %131 = vector.broadcast %cst_40 : f32 to vector<1x128xf32>
    %132 = arith.addf %128, %131 : vector<1x128xf32>
    %133 = math.rsqrt %132 : vector<1x128xf32>
    %134 = vector.broadcast %133 : vector<1x128xf32> to vector<32x128xf32>
    %135 = arith.mulf %130, %134 : vector<32x128xf32>
    %136 = vector.broadcast %15 : vector<32x1xf32> to vector<32x128xf32>
    %137 = arith.mulf %135, %136 : vector<32x128xf32>
    %138 = vector.broadcast %16 : vector<32x1xf32> to vector<32x128xf32>
    %139 = arith.addf %137, %138 : vector<32x128xf32>
    %140 = arith.addf %1, %139 : vector<32x128xf32>
    %c0_41 = arith.constant 0 : index
    %c0_42 = arith.constant 0 : index
    %141 = vector.load %arg7[%c0_41, %c0_42] : memref<32x128xf32, #tpu.memory_space<vmem>>, vector<32x128xf32>
    tpu.vector_store %arg7[%c0_41, %c0_42], %140 {strides = array<i32>} : memref<32x128xf32, #tpu.memory_space<vmem>>, vector<32x128xf32>,
    return
  }
  func.func @transform_0(%arg0: i32) -> (i32, i32) {
    %c0_i32 = arith.constant 0 : i32
    %c0_i32_0 = arith.constant 0 : i32
    return %c0_i32, %arg0 : i32, i32
  }
  func.func @transform_1(%arg0: i32) -> (i32, i32) {
    %c0_i32 = arith.constant 0 : i32
    %c0_i32_0 = arith.constant 0 : i32
    %c0_i32_1 = arith.constant 0 : i32
    return %c0_i32, %c0_i32_0 : i32, i32
  }
  func.func @transform_2(%arg0: i32) -> (i32, i32) {
    %c0_i32 = arith.constant 0 : i32
    %c0_i32_0 = arith.constant 0 : i32
    %c0_i32_1 = arith.constant 0 : i32
    return %c0_i32, %c0_i32_0 : i32, i32
  }
  func.func @transform_3(%arg0: i32) -> (i32, i32) {
    %c0_i32 = arith.constant 0 : i32
    %c0_i32_0 = arith.constant 0 : i32
    %c0_i32_1 = arith.constant 0 : i32
    return %c0_i32, %c0_i32_0 : i32, i32
  }
  func.func @transform_4(%arg0: i32) -> (i32, i32) {
    %c0_i32 = arith.constant 0 : i32
    %c0_i32_0 = arith.constant 0 : i32
    %c0_i32_1 = arith.constant 0 : i32
    return %c0_i32, %c0_i32_0 : i32, i32
  }
  func.func @transform_5(%arg0: i32) -> (i32, i32) {
    %c0_i32 = arith.constant 0 : i32
    %c0_i32_0 = arith.constant 0 : i32
    %c0_i32_1 = arith.constant 0 : i32
    return %c0_i32, %c0_i32_0 : i32, i32
  }
  func.func @transform_6(%arg0: i32) -> (i32, i32) {
    %c0_i32 = arith.constant 0 : i32
    %c0_i32_0 = arith.constant 0 : i32
    return %c0_i32, %arg0 : i32, i32
  }
}

</mosaic_0001>

<llo_original>
// kernel: tpu_custom_call.1
$region0: #{tpu_custom_call.1}
  #allocation0 [shape = 'u32[]', space=smem, size = 0x4, offset = 0x4, fixed_abs, tag = 'smem constant byte address 0x4 - core index']
  #allocation1 [shape = 'u32[144,128]{1,0:T(1,128)}', space=vmem, size = 0x12000, scoped, tag = 'internal scratch']
  %s0 = inlined_call_operand.vmem [shape: f32[40,128], index: 0, kind: input, shape index: {}]
  %s1 = inlined_call_operand.vmem [shape: f32[16,32], index: 1, kind: input, shape index: {}]
  %s2 = inlined_call_operand.vmem [shape: f32[6,16], index: 2, kind: input, shape index: {}]
  %s3 = inlined_call_operand.vmem [shape: f32[32,16], index: 3, kind: input, shape index: {}]
  %s4 = inlined_call_operand.vmem [shape: f32[16,6], index: 4, kind: input, shape index: {}]
  %s5 = inlined_call_operand.vmem [shape: f32[32,13], index: 5, kind: input, shape index: {}]
  %s6 = inlined_call_operand.hbm [shape: f32[32,128], index: 6, kind: output, shape index: {}]
  %s7 = sld [smem:[#allocation0]]
  $region34: #{tpu_custom_call.1} parent=0
    _
  %s9 = ssub.s32 1, %s7
  %s10 = scalar_select 0, %s9, %s7
  $region1: #{tpu_custom_call.1} parent=0
    #allocation2 [shape = 'u8[16384]{0}', space=vmem, size = 0x4000, scoped, tag = 'output window, operand 0, single buffered']
    #allocation3 [shape = 's32[1]{0}', space=sflag, size = 0x4, scoped, tag = 'scoped memory for tpu_custom_call.1']
    %11 = vsyncpa [#allocation3], 0
    // Predicated region
    $region2: #{tpu_custom_call.1} parent=1 // pred_check
      _
    $region3: #{tpu_custom_call.1} parent=1 // pred_check_branch
      %13 = sbr.rel (0) target = $region5
    $region4: #{tpu_custom_call.1} parent=1 // pred_region
      _
    $region5: #{tpu_custom_call.1} parent=1 // pred_fallthru
      _
    // Predicated region
    $region6: #{tpu_custom_call.1} parent=1 // pred_check
      _
    $region7: #{tpu_custom_call.1} parent=1 // pred_check_branch
      %15 = sbr.rel (0) target = $region9
    $region8: #{tpu_custom_call.1} parent=1 // pred_region
      _
    $region9: #{tpu_custom_call.1} parent=1 // pred_fallthru
      _
    // Predicated region
    $region10: #{tpu_custom_call.1} parent=1 // pred_check
      _
    $region11: #{tpu_custom_call.1} parent=1 // pred_check_branch
      %17 = sbr.rel (0) target = $region13
    $region12: #{tpu_custom_call.1} parent=1 // pred_region
      _
    $region13: #{tpu_custom_call.1} parent=1 // pred_fallthru
      _
    // Predicated region
    $region14: #{tpu_custom_call.1} parent=1 // pred_check
      _
    $region15: #{tpu_custom_call.1} parent=1 // pred_check_branch
      %19 = sbr.rel (0) target = $region17
    $region16: #{tpu_custom_call.1} parent=1 // pred_region
      _
    $region17: #{tpu_custom_call.1} parent=1 // pred_fallthru
      _
    // Predicated region
    $region18: #{tpu_custom_call.1} parent=1 // pred_check
      _
    $region19: #{tpu_custom_call.1} parent=1 // pred_check_branch
      %21 = sbr.rel (0) target = $region21
    $region20: #{tpu_custom_call.1} parent=1 // pred_region
      _
    $region21: #{tpu_custom_call.1} parent=1 // pred_fallthru
      _
    // Predicated region
    $region22: #{tpu_custom_call.1} parent=1 // pred_check
      _
    $region23: #{tpu_custom_call.1} parent=1 // pred_check_branch
      %23 = sbr.rel (0) target = $region25
    $region24: #{tpu_custom_call.1} parent=1 // pred_region
      _
    $region25: #{tpu_custom_call.1} parent=1 // pred_fallthru
      _
    %v24 = vld [vmem:[%s0] sm:$0xff]
    %v25 = vld [vmem:[%s0 + $0x8] sm:$0xff]
    %v26 = vld [vmem:[%s0 + $0x10] sm:$0xff]
    %v27 = vld [vmem:[%s0 + $0x18] sm:$0xff]
    %v28 = vld [vmem:[%s0 + $0x20] sm:$0xff]
    %v29 = vld [vmem:[%s5] sm:$0xff]
    %v30 = vld [vmem:[%s5 + $0x8] sm:$0xff]
    %v31 = vld [vmem:[%s5 + $0x10] sm:$0xff]
    %v32 = vld [vmem:[%s5 + $0x18] sm:$0xff]
    %v33 = vld [vmem:[%s1] sm:$0xff]
    %v34 = vld [vmem:[%s1 + $0x8] sm:$0xff]
    %v35 = vld [vmem:[%s2] sm:$0x3f]
    %v36 = vld [vmem:[%s3] sm:$0xff]
    %v37 = vld [vmem:[%s3 + $0x8] sm:$0xff]
    %v38 = vld [vmem:[%s3 + $0x10] sm:$0xff]
    %v39 = vld [vmem:[%s3 + $0x18] sm:$0xff]
    %v40 = vld [vmem:[%s4] sm:$0xff]
    %v41 = vld [vmem:[%s4 + $0x8] sm:$0xff]
    %vm42 = vcmp.ge.f32.partialorder %v28, 0.5
    %44 = vset.pattern.permute.xlu0 0
    %45 = vperm.xlu0 %44, %v29
    %v46 = vpop.permute.xlu0 %45
    %49 = vset.pattern.permute.xlu0 0
    %50 = vperm.xlu0 %49, %v30
    %v51 = vpop.permute.xlu0 %50
    %vm53 = vcmask 261120
    %v55 = vsel %vm53, %v33, 0
    %v58 = vsel %vm53, %v34, 0
    %60 = vmatprep.subr.mxu0 0.0
    %61 = vmatpush1.msra.mxu0 %v24
    %62 = vmatprep.subr.mxu0 0.0
    %63 = vmatpush1.msra.mxu0 %v25
    %64 = vmatprep.subr.mxu0 0.0
    %65 = vmatpush1.msra.mxu0 %v26
    %66 = vmatprep.subr.mxu0 0.0
    %67 = vmatpush1.msra.mxu0 %v27
    %68 = vmatprep.subr.mxu0 0.0
    %69 = vmatpush1.msra.mxu0 0.0
    %70 = vmatprep.subr.mxu0 0.0
    %71 = vmatpush1.msra.mxu0 0.0
    %72 = vmatprep.subr.mxu0 0.0
    %73 = vmatpush1.msra.mxu0 0.0
    %74 = vmatprep.subr.mxu0 0.0
    %75 = vmatpush1.msra.mxu0 0.0
    %76 = vmatprep.subr.mxu0 0.0
    %77 = vmatpush1.msra.mxu0 0.0
    %78 = vmatprep.subr.mxu0 0.0
    %79 = vmatpush1.msra.mxu0 0.0
    %80 = vmatprep.subr.mxu0 0.0
    %81 = vmatpush1.msra.mxu0 0.0
    %82 = vmatprep.subr.mxu0 0.0
    %83 = vmatpush1.msra.mxu0 0.0
    %84 = vmatprep.subr.mxu0 0.0
    %85 = vmatpush1.msra.mxu0 0.0
    %86 = vmatprep.subr.mxu0 0.0
    %87 = vmatpush1.msra.mxu0 0.0
    %88 = vmatprep.subr.mxu0 0.0
    %89 = vmatpush1.msra.mxu0 0.0
    %90 = vmatprep.subr.mxu0 0.0
    %91 = vmatpush1.msra.mxu0 0.0
    %92 = vmatprep.subr.mxu0 0.0
    %93 = vmatpush1.msra.mxu0 0.0
    %94 = vmatprep.subr.mxu0 0.0
    %95 = vmatpush1.msra.mxu0 0.0
    %96 = vmatprep.subr.mxu0 0.0
    %97 = vmatpush1.msra.mxu0 0.0
    %98 = vmatprep.subr.mxu0 0.0
    %99 = vmatpush1.msra.mxu0 0.0
    %100 = vmatprep.subr.mxu0 0.0
    %101 = vmatpush1.msra.mxu0 0.0
    %102 = vmatprep.subr.mxu0 0.0
    %103 = vmatpush1.msra.mxu0 0.0
    %104 = vmatprep.subr.mxu0 0.0
    %105 = vmatpush1.msra.mxu0 0.0
    %106 = vmatprep.subr.mxu0 0.0
    %107 = vmatpush1.msra.mxu0 0.0
    %108 = vmatprep.subr.mxu0 0.0
    %109 = vmatpush1.msra.mxu0 0.0
    %110 = vmatprep.subr.mxu0 0.0
    %111 = vmatpush1.msra.mxu0 0.0
    %112 = vmatprep.subr.mxu0 0.0
    %113 = vmatpush1.msra.mxu0 0.0
    %114 = vmatprep.subr.mxu0 0.0
    %115 = vmatpush1.msra.mxu0 0.0
    %116 = vmatprep.subr.mxu0 0.0
    %117 = vmatpush1.msra.mxu0 0.0
    %118 = vmatprep.subr.mxu0 0.0
    %119 = vmatpush1.msra.mxu0 0.0
    %120 = vmatprep.subr.mxu0 0.0
    %121 = vmatpush1.msra.mxu0 0.0
    %122 = vmatprep.subr.mxu0 0.0
    %123 = vmatpush1.msra.mxu0 0.0
    %124 = vmatprep.mubr.f32.mxu0 0.0
    %125 = vmatmul.mubr.f32.gmra.mrb[0].mxu0 %v55
    %v126 = vpop.f32.mrb[0].mxu0
    %v127 = vadd.f32 %v46, %v126
    %v128 = vpop.f32.mrb[0].mxu0
    %129 = vmatprep.mubr.f32.mxu0 0.0
    %130 = vmatmul.mubr.f32.gmra.mrb[0].mxu0 %v58
    %v131 = vpop.f32.mrb[0].mxu0
    %v132 = vadd.f32 %v51, %v131
    %v133 = vpop.f32.mrb[0].mxu0
    %134 = vdwg.mxu0
    %v135 = vadd.f32 %v127, %v132
    %v136 = vrot.slane %v135, 4
    %v137 = vadd.f32 %v135, %v136
    %v138 = vrot.slane %v137, 2
    %v139 = vadd.f32 %v137, %v138
    %v140 = vrot.slane %v139, 1
    %v141 = vadd.f32 %v139, %v140
    %v142 = vrcp.pop 16.0
    %v143 = vmul.f32 %v141, %v142
    %v144 = vmul.f32 %v127, %v127
    %v145 = vmul.f32 %v132, %v132
    %v146 = vadd.f32 %v144, %v145
    %v147 = vrot.slane %v146, 4
    %v148 = vadd.f32 %v146, %v147
    %v149 = vrot.slane %v148, 2
    %v150 = vadd.f32 %v148, %v149
    %v151 = vrot.slane %v150, 1
    %v152 = vadd.f32 %v150, %v151
    %v153 = vmul.f32 %v152, %v142
    %v154 = vmul.f32 %v143, %v143
    %v155 = vsub.f32 %v153, %v154
    %v156 = vmax.f32 %v155, 0.0
    %v157 = vsub.f32 %v127, %v143
    %v158 = vsub.f32 %v132, %v143
    %v159 = vadd.f32 %v156, 1e-05
    %v160 = vrsqrt.pop %v159
    %v161 = vmul.f32 %v157, %v160
    %v162 = vmul.f32 %v158, %v160
    %163 = vset.pattern.permute.xlu0 1
    %164 = vperm.xlu0 %163, %v29
    %v165 = vpop.permute.xlu0 %164
    %167 = vset.pattern.permute.xlu0 1
    %168 = vperm.xlu0 %167, %v30
    %v169 = vpop.permute.xlu0 %168
    %v171 = vmul.f32 %v161, %v165
    %v172 = vmul.f32 %v162, %v169
    %173 = vset.pattern.permute.xlu0 2
    %174 = vperm.xlu0 %173, %v29
    %v175 = vpop.permute.xlu0 %174
    %177 = vset.pattern.permute.xlu0 2
    %178 = vperm.xlu0 %177, %v30
    %v179 = vpop.permute.xlu0 %178
    %v181 = vadd.f32 %v171, %v175
    %v182 = vadd.f32 %v172, %v179
    %v183 = vmax.f32 %v181, 0.0
    %v184 = vmax.f32 %v182, 0.0
    %185 = vset.pattern.permute.xlu0 3
    %186 = vperm.xlu0 %185, %v29
    %v187 = vpop.permute.xlu0 %186
    %vm189 = vcmask 130048
    %v191 = vsel %vm189, %v35, 0
    %193 = vmatprep.subr.mxu0 0.0
    %194 = vmatpush1.msra.mxu0 %v183
    %195 = vmatprep.subr.mxu0 0.0
    %196 = vmatpush1.msra.mxu0 %v184
    %197 = vmatprep.subr.mxu0 0.0
    %198 = vmatpush1.msra.mxu0 0.0
    %199 = vmatprep.subr.mxu0 0.0
    %200 = vmatpush1.msra.mxu0 0.0
    %201 = vmatprep.subr.mxu0 0.0
    %202 = vmatpush1.msra.mxu0 0.0
    %203 = vmatprep.subr.mxu0 0.0
    %204 = vmatpush1.msra.mxu0 0.0
    %205 = vmatprep.subr.mxu0 0.0
    %206 = vmatpush1.msra.mxu0 0.0
    %207 = vmatprep.subr.mxu0 0.0
    %208 = vmatpush1.msra.mxu0 0.0
    %209 = vmatprep.subr.mxu0 0.0
    %210 = vmatpush1.msra.mxu0 0.0
    %211 = vmatprep.subr.mxu0 0.0
    %212 = vmatpush1.msra.mxu0 0.0
    %213 = vmatprep.subr.mxu0 0.0
    %214 = vmatpush1.msra.mxu0 0.0
    %215 = vmatprep.subr.mxu0 0.0
    %216 = vmatpush1.msra.mxu0 0.0
    %217 = vmatprep.subr.mxu0 0.0
    %218 = vmatpush1.msra.mxu0 0.0
    %219 = vmatprep.subr.mxu0 0.0
    %220 = vmatpush1.msra.mxu0 0.0
    %221 = vmatprep.subr.mxu0 0.0
    %222 = vmatpush1.msra.mxu0 0.0
    %223 = vmatprep.subr.mxu0 0.0
    %224 = vmatpush1.msra.mxu0 0.0
    %225 = vmatprep.subr.mxu0 0.0
    %226 = vmatpush1.msra.mxu0 0.0
    %227 = vmatprep.subr.mxu0 0.0
    %228 = vmatpush1.msra.mxu0 0.0
    %229 = vmatprep.subr.mxu0 0.0
    %230 = vmatpush1.msra.mxu0 0.0
    %231 = vmatprep.subr.mxu0 0.0
    %232 = vmatpush1.msra.mxu0 0.0
    %233 = vmatprep.subr.mxu0 0.0
    %234 = vmatpush1.msra.mxu0 0.0
    %235 = vmatprep.subr.mxu0 0.0
    %236 = vmatpush1.msra.mxu0 0.0
    %237 = vmatprep.subr.mxu0 0.0
    %238 = vmatpush1.msra.mxu0 0.0
    %239 = vmatprep.subr.mxu0 0.0
    %240 = vmatpush1.msra.mxu0 0.0
    %241 = vmatprep.subr.mxu0 0.0
    %242 = vmatpush1.msra.mxu0 0.0
    %243 = vmatprep.subr.mxu0 0.0
    %244 = vmatpush1.msra.mxu0 0.0
    %245 = vmatprep.subr.mxu0 0.0
    %246 = vmatpush1.msra.mxu0 0.0
    %247 = vmatprep.subr.mxu0 0.0
    %248 = vmatpush1.msra.mxu0 0.0
    %249 = vmatprep.subr.mxu0 0.0
    %250 = vmatpush1.msra.mxu0 0.0
    %251 = vmatprep.subr.mxu0 0.0
    %252 = vmatpush1.msra.mxu0 0.0
    %253 = vmatprep.subr.mxu0 0.0
    %254 = vmatpush1.msra.mxu0 0.0
    %255 = vmatprep.subr.mxu0 0.0
    %256 = vmatpush1.msra.mxu0 0.0
    %257 = vmatprep.mubr.f32.mxu0 0.0
    %258 = vmatmul.mubr.f32.gmra.mrb[0].mxu0 %v191
    %v259 = vpop.f32.mrb[0].mxu0
    %v260 = vadd.f32 %v187, %v259
    %v261 = vpop.f32.mrb[0].mxu0
    %262 = vdwg.mxu0
    %vm263 = vcmask 1045504
    %v264 = vsel %vm263, %v260, 0.0
    %v265 = vrot.slane %v264, 4
    %v266 = vadd.f32 %v264, %v265
    %v267 = vrot.slane %v266, 2
    %v268 = vadd.f32 %v266, %v267
    %v269 = vrot.slane %v268, 1
    %v270 = vadd.f32 %v268, %v269
    %v271 = vrcp.pop 6.0
    %v272 = vmul.f32 %v270, %v271
    %v273 = vmul.f32 %v260, %v260
    %v274 = vsel %vm263, %v273, 0.0
    %v275 = vrot.slane %v274, 4
    %v276 = vadd.f32 %v274, %v275
    %v277 = vrot.slane %v276, 2
    %v278 = vadd.f32 %v276, %v277
    %v279 = vrot.slane %v278, 1
    %v280 = vadd.f32 %v278, %v279
    %v281 = vmul.f32 %v280, %v271
    %v282 = vmul.f32 %v272, %v272
    %v283 = vsub.f32 %v281, %v282
    %v284 = vmax.f32 %v283, 0.0
    %v285 = vsub.f32 %v260, %v272
    %v286 = vadd.f32 %v284, 1e-05
    %v287 = vrsqrt.pop %v286
    %v288 = vmul.f32 %v285, %v287
    %289 = vset.pattern.permute.xlu0 4
    %290 = vperm.xlu0 %289, %v29
    %v291 = vpop.permute.xlu0 %290
    %v293 = vmul.f32 %v288, %v291
    %294 = vset.pattern.permute.xlu0 5
    %295 = vperm.xlu0 %294, %v29
    %v296 = vpop.permute.xlu0 %295
    %v298 = vadd.f32 %v293, %v296
    %v299 = vmax.f32 %v298, 0.0
    %v300 = vsel %vm42, 1, 0
    %v301 = vlaneseq
    %v302 = vshrl.u32 %v301, 7
    %v303 = vsub.s32 0, %v302
    %v304 = vrot.slane %v300, %v303
    %vm305 = vcmp.eq.s32.totalorder %v304, 1
    %306 = vset.pattern.permute.xlu0 12
    %307 = vperm.xlu0 %306, %v29
    %v308 = vpop.permute.xlu0 %307
    %v310 = vsel %vm305, %v299, %v308
    %311 = vset.pattern.permute.xlu0 9
    %312 = vperm.xlu0 %311, %v29
    %v313 = vpop.permute.xlu0 %312
    %315 = vset.pattern.permute.xlu0 9
    %316 = vperm.xlu0 %315, %v30
    %v317 = vpop.permute.xlu0 %316
    %vm319 = vcmask 48128
    %v321 = vsel %vm319, %v40, 0
    %v324 = vsel %vm319, %v41, 0
    %v327 = vsel %vm263, %v310, 0
    %329 = vmatprep.subr.mxu0 0.0
    %330 = vmatpush1.msra.mxu0 %v327
    %331 = vmatprep.subr.mxu0 0.0
    %332 = vmatpush1.msra.mxu0 0.0
    %333 = vmatprep.subr.mxu0 0.0
    %334 = vmatpush1.msra.mxu0 0.0
    %335 = vmatprep.subr.mxu0 0.0
    %336 = vmatpush1.msra.mxu0 0.0
    %337 = vmatprep.subr.mxu0 0.0
    %338 = vmatpush1.msra.mxu0 0.0
    %339 = vmatprep.subr.mxu0 0.0
    %340 = vmatpush1.msra.mxu0 0.0
    %341 = vmatprep.subr.mxu0 0.0
    %342 = vmatpush1.msra.mxu0 0.0
    %343 = vmatprep.subr.mxu0 0.0
    %344 = vmatpush1.msra.mxu0 0.0
    %345 = vmatprep.subr.mxu0 0.0
    %346 = vmatpush1.msra.mxu0 0.0
    %347 = vmatprep.subr.mxu0 0.0
    %348 = vmatpush1.msra.mxu0 0.0
    %349 = vmatprep.subr.mxu0 0.0
    %350 = vmatpush1.msra.mxu0 0.0
    %351 = vmatprep.subr.mxu0 0.0
    %352 = vmatpush1.msra.mxu0 0.0
    %353 = vmatprep.subr.mxu0 0.0
    %354 = vmatpush1.msra.mxu0 0.0
    %355 = vmatprep.subr.mxu0 0.0
    %356 = vmatpush1.msra.mxu0 0.0
    %357 = vmatprep.subr.mxu0 0.0
    %358 = vmatpush1.msra.mxu0 0.0
    %359 = vmatprep.subr.mxu0 0.0
    %360 = vmatpush1.msra.mxu0 0.0
    %361 = vmatprep.subr.mxu0 0.0
    %362 = vmatpush1.msra.mxu0 0.0
    %363 = vmatprep.subr.mxu0 0.0
    %364 = vmatpush1.msra.mxu0 0.0
    %365 = vmatprep.subr.mxu0 0.0
    %366 = vmatpush1.msra.mxu0 0.0
    %367 = vmatprep.subr.mxu0 0.0
    %368 = vmatpush1.msra.mxu0 0.0
    %369 = vmatprep.subr.mxu0 0.0
    %370 = vmatpush1.msra.mxu0 0.0
    %371 = vmatprep.subr.mxu0 0.0
    %372 = vmatpush1.msra.mxu0 0.0
    %373 = vmatprep.subr.mxu0 0.0
    %374 = vmatpush1.msra.mxu0 0.0
    %375 = vmatprep.subr.mxu0 0.0
    %376 = vmatpush1.msra.mxu0 0.0
    %377 = vmatprep.subr.mxu0 0.0
    %378 = vmatpush1.msra.mxu0 0.0
    %379 = vmatprep.subr.mxu0 0.0
    %380 = vmatpush1.msra.mxu0 0.0
    %381 = vmatprep.subr.mxu0 0.0
    %382 = vmatpush1.msra.mxu0 0.0
    %383 = vmatprep.subr.mxu0 0.0
    %384 = vmatpush1.msra.mxu0 0.0
    %385 = vmatprep.subr.mxu0 0.0
    %386 = vmatpush1.msra.mxu0 0.0
    %387 = vmatprep.subr.mxu0 0.0
    %388 = vmatpush1.msra.mxu0 0.0
    %389 = vmatprep.subr.mxu0 0.0
    %390 = vmatpush1.msra.mxu0 0.0
    %391 = vmatprep.subr.mxu0 0.0
    %392 = vmatpush1.msra.mxu0 0.0
    %393 = vmatprep.mubr.f32.mxu0 0.0
    %394 = vmatmul.mubr.f32.gmra.mrb[0].mxu0 %v321
    %v395 = vpop.f32.mrb[0].mxu0
    %v396 = vadd.f32 %v313, %v395
    %v397 = vpop.f32.mrb[0].mxu0
    %398 = vmatprep.mubr.f32.mxu0 0.0
    %399 = vmatmul.mubr.f32.gmra.mrb[0].mxu0 %v324
    %v400 = vpop.f32.mrb[0].mxu0
    %v401 = vadd.f32 %v317, %v400
    %v402 = vpop.f32.mrb[0].mxu0
    %403 = vdwg.mxu0
    %v404 = vadd.f32 %v396, %v401
    %v405 = vrot.slane %v404, 4
    %v406 = vadd.f32 %v404, %v405
    %v407 = vrot.slane %v406, 2
    %v408 = vadd.f32 %v406, %v407
    %v409 = vrot.slane %v408, 1
    %v410 = vadd.f32 %v408, %v409
    %v411 = vmul.f32 %v410, %v142
    %v412 = vmul.f32 %v396, %v396
    %v413 = vmul.f32 %v401, %v401
    %v414 = vadd.f32 %v412, %v413
    %v415 = vrot.slane %v414, 4
    %v416 = vadd.f32 %v414, %v415
    %v417 = vrot.slane %v416, 2
    %v418 = vadd.f32 %v416, %v417
    %v419 = vrot.slane %v418, 1
    %v420 = vadd.f32 %v418, %v419
    %v421 = vmul.f32 %v420, %v142
    %v422 = vmul.f32 %v411, %v411
    %v423 = vsub.f32 %v421, %v422
    %v424 = vmax.f32 %v423, 0.0
    %v425 = vsub.f32 %v396, %v411
    %v426 = vsub.f32 %v401, %v411
    %v427 = vadd.f32 %v424, 1e-05
    %v428 = vrsqrt.pop %v427
    %v429 = vmul.f32 %v425, %v428
    %v430 = vmul.f32 %v426, %v428
    %431 = vset.pattern.permute.xlu0 10
    %432 = vperm.xlu0 %431, %v29
    %v433 = vpop.permute.xlu0 %432
    %435 = vset.pattern.permute.xlu0 10
    %436 = vperm.xlu0 %435, %v30
    %v437 = vpop.permute.xlu0 %436
    %v439 = vmul.f32 %v429, %v433
    %v440 = vmul.f32 %v430, %v437
    %441 = vset.pattern.permute.xlu0 11
    %442 = vperm.xlu0 %441, %v29
    %v443 = vpop.permute.xlu0 %442
    %445 = vset.pattern.permute.xlu0 11
    %446 = vperm.xlu0 %445, %v30
    %v447 = vpop.permute.xlu0 %446
    %v449 = vadd.f32 %v439, %v443
    %v450 = vadd.f32 %v440, %v447
    %451 = vset.pattern.permute.xlu0 6
    %452 = vperm.xlu0 %451, %v29
    %v453 = vpop.permute.xlu0 %452
    %455 = vset.pattern.permute.xlu0 6
    %456 = vperm.xlu0 %455, %v30
    %v457 = vpop.permute.xlu0 %456
    %460 = vset.pattern.permute.xlu0 6
    %461 = vperm.xlu0 %460, %v31
    %v462 = vpop.permute.xlu0 %461
    %465 = vset.pattern.permute.xlu0 6
    %466 = vperm.xlu0 %465, %v32
    %v467 = vpop.permute.xlu0 %466
    %v470 = vsel %vm189, %v36, 0
    %v473 = vsel %vm189, %v37, 0
    %v476 = vsel %vm189, %v38, 0
    %v479 = vsel %vm189, %v39, 0
    %481 = vmatprep.subr.mxu0 0.0
    %482 = vmatpush1.msra.mxu0 %v449
    %483 = vmatprep.subr.mxu0 0.0
    %484 = vmatpush1.msra.mxu0 %v450
    %485 = vmatprep.subr.mxu0 0.0
    %486 = vmatpush1.msra.mxu0 0.0
    %487 = vmatprep.subr.mxu0 0.0
    %488 = vmatpush1.msra.mxu0 0.0
    %489 = vmatprep.subr.mxu0 0.0
    %490 = vmatpush1.msra.mxu0 0.0
    %491 = vmatprep.subr.mxu0 0.0
    %492 = vmatpush1.msra.mxu0 0.0
    %493 = vmatprep.subr.mxu0 0.0
    %494 = vmatpush1.msra.mxu0 0.0
    %495 = vmatprep.subr.mxu0 0.0
    %496 = vmatpush1.msra.mxu0 0.0
    %497 = vmatprep.subr.mxu0 0.0
    %498 = vmatpush1.msra.mxu0 0.0
    %499 = vmatprep.subr.mxu0 0.0
    %500 = vmatpush1.msra.mxu0 0.0
    %501 = vmatprep.subr.mxu0 0.0
    %502 = vmatpush1.msra.mxu0 0.0
    %503 = vmatprep.subr.mxu0 0.0
    %504 = vmatpush1.msra.mxu0 0.0
    %505 = vmatprep.subr.mxu0 0.0
    %506 = vmatpush1.msra.mxu0 0.0
    %507 = vmatprep.subr.mxu0 0.0
    %508 = vmatpush1.msra.mxu0 0.0
    %509 = vmatprep.subr.mxu0 0.0
    %510 = vmatpush1.msra.mxu0 0.0
    %511 = vmatprep.subr.mxu0 0.0
    %512 = vmatpush1.msra.mxu0 0.0
    %513 = vmatprep.subr.mxu0 0.0
    %514 = vmatpush1.msra.mxu0 0.0
    %515 = vmatprep.subr.mxu0 0.0
    %516 = vmatpush1.msra.mxu0 0.0
    %517 = vmatprep.subr.mxu0 0.0
    %518 = vmatpush1.msra.mxu0 0.0
    %519 = vmatprep.subr.mxu0 0.0
    %520 = vmatpush1.msra.mxu0 0.0
    %521 = vmatprep.subr.mxu0 0.0
    %522 = vmatpush1.msra.mxu0 0.0
    %523 = vmatprep.subr.mxu0 0.0
    %524 = vmatpush1.msra.mxu0 0.0
    %525 = vmatprep.subr.mxu0 0.0
    %526 = vmatpush1.msra.mxu0 0.0
    %527 = vmatprep.subr.mxu0 0.0
    %528 = vmatpush1.msra.mxu0 0.0
    %529 = vmatprep.subr.mxu0 0.0
    %530 = vmatpush1.msra.mxu0 0.0
    %531 = vmatprep.subr.mxu0 0.0
    %532 = vmatpush1.msra.mxu0 0.0
    %533 = vmatprep.subr.mxu0 0.0
    %534 = vmatpush1.msra.mxu0 0.0
    %535 = vmatprep.subr.mxu0 0.0
    %536 = vmatpush1.msra.mxu0 0.0
    %537 = vmatprep.subr.mxu0 0.0
    %538 = vmatpush1.msra.mxu0 0.0
    %539 = vmatprep.subr.mxu0 0.0
    %540 = vmatpush1.msra.mxu0 0.0
    %541 = vmatprep.subr.mxu0 0.0
    %542 = vmatpush1.msra.mxu0 0.0
    %543 = vmatprep.subr.mxu0 0.0
    %544 = vmatpush1.msra.mxu0 0.0
    %545 = vmatprep.mubr.f32.mxu0 0.0
    %546 = vmatmul.mubr.f32.gmra.mrb[0].mxu0 %v470
    %v547 = vpop.f32.mrb[0].mxu0
    %v548 = vadd.f32 %v453, %v547
    %v549 = vpop.f32.mrb[0].mxu0
    %550 = vmatprep.mubr.f32.mxu0 0.0
    %551 = vmatmul.mubr.f32.gmra.mrb[0].mxu0 %v473
    %v552 = vpop.f32.mrb[0].mxu0
    %v553 = vadd.f32 %v457, %v552
    %v554 = vpop.f32.mrb[0].mxu0
    %555 = vmatprep.mubr.f32.mxu0 0.0
    %556 = vmatmul.mubr.f32.gmra.mrb[0].mxu0 %v476
    %v557 = vpop.f32.mrb[0].mxu0
    %v558 = vadd.f32 %v462, %v557
    %v559 = vpop.f32.mrb[0].mxu0
    %560 = vmatprep.mubr.f32.mxu0 0.0
    %561 = vmatmul.mubr.f32.gmra.mrb[0].mxu0 %v479
    %v562 = vpop.f32.mrb[0].mxu0
    %v563 = vadd.f32 %v467, %v562
    %v564 = vpop.f32.mrb[0].mxu0
    %565 = vdwg.mxu0
    %v566 = vadd.f32 %v548, %v553
    %v567 = vadd.f32 %v566, %v558
    %v568 = vadd.f32 %v567, %v563
    %v569 = vrot.slane %v568, 4
    %v570 = vadd.f32 %v568, %v569
    %v571 = vrot.slane %v570, 2
    %v572 = vadd.f32 %v570, %v571
    %v573 = vrot.slane %v572, 1
    %v574 = vadd.f32 %v572, %v573
    %v575 = vrcp.pop 32.0
    %v576 = vmul.f32 %v574, %v575
    %v577 = vmul.f32 %v548, %v548
    %v578 = vmul.f32 %v553, %v553
    %v579 = vmul.f32 %v558, %v558
    %v580 = vmul.f32 %v563, %v563
    %v581 = vadd.f32 %v577, %v578
    %v582 = vadd.f32 %v581, %v579
    %v583 = vadd.f32 %v582, %v580
    %v584 = vrot.slane %v583, 4
    %v585 = vadd.f32 %v583, %v584
    %v586 = vrot.slane %v585, 2
    %v587 = vadd.f32 %v585, %v586
    %v588 = vrot.slane %v587, 1
    %v589 = vadd.f32 %v587, %v588
    %v590 = vmul.f32 %v589, %v575
    %v591 = vmul.f32 %v576, %v576
    %v592 = vsub.f32 %v590, %v591
    %v593 = vmax.f32 %v592, 0.0
    %v594 = vsub.f32 %v548, %v576
    %v595 = vsub.f32 %v553, %v576
    %v596 = vsub.f32 %v558, %v576
    %v597 = vsub.f32 %v563, %v576
    %v598 = vadd.f32 %v593, 1e-05
    %v599 = vrsqrt.pop %v598
    %v600 = vmul.f32 %v594, %v599
    %v601 = vmul.f32 %v595, %v599
    %v602 = vmul.f32 %v596, %v599
    %v603 = vmul.f32 %v597, %v599
    %604 = vset.pattern.permute.xlu0 7
    %605 = vperm.xlu0 %604, %v29
    %v606 = vpop.permute.xlu0 %605
    %608 = vset.pattern.permute.xlu0 7
    %609 = vperm.xlu0 %608, %v30
    %v610 = vpop.permute.xlu0 %609
    %612 = vset.pattern.permute.xlu0 7
    %613 = vperm.xlu0 %612, %v31
    %v614 = vpop.permute.xlu0 %613
    %616 = vset.pattern.permute.xlu0 7
    %617 = vperm.xlu0 %616, %v32
    %v618 = vpop.permute.xlu0 %617
    %v620 = vmul.f32 %v600, %v606
    %v621 = vmul.f32 %v601, %v610
    %v622 = vmul.f32 %v602, %v614
    %v623 = vmul.f32 %v603, %v618
    %624 = vset.pattern.permute.xlu0 8
    %625 = vperm.xlu0 %624, %v29
    %v626 = vpop.permute.xlu0 %625
    %628 = vset.pattern.permute.xlu0 8
    %629 = vperm.xlu0 %628, %v30
    %v630 = vpop.permute.xlu0 %629
    %632 = vset.pattern.permute.xlu0 8
    %633 = vperm.xlu0 %632, %v31
    %v634 = vpop.permute.xlu0 %633
    %636 = vset.pattern.permute.xlu0 8
    %637 = vperm.xlu0 %636, %v32
    %v638 = vpop.permute.xlu0 %637
    %v640 = vadd.f32 %v620, %v626
    %v641 = vadd.f32 %v621, %v630
    %v642 = vadd.f32 %v622, %v634
    %v643 = vadd.f32 %v623, %v638
    %v644 = vadd.f32 %v24, %v640
    %v645 = vadd.f32 %v25, %v641
    %v646 = vadd.f32 %v26, %v642
    %v647 = vadd.f32 %v27, %v643
    %648 = vst [vmem:[#allocation2] sm:$0xff] %v644
    %649 = vst [vmem:[#allocation2 + $0x8] sm:$0xff] %v645
    %650 = vst [vmem:[#allocation2 + $0x10] sm:$0xff] %v646
    %651 = vst [vmem:[#allocation2 + $0x18] sm:$0xff] %v647
    // Predicated region
    $region26: #{tpu_custom_call.1} parent=1 // pred_check
      _
    $region27: #{tpu_custom_call.1} parent=1 // pred_check_branch
      %653 = sbr.rel (0) target = $region29
    $region28: #{tpu_custom_call.1} parent=1 // pred_region
      %s655 = ssub.s32 512, 512
      %656 = vsyncadd [#allocation3], %s655
      %s657 = sshll.u32 [#allocation2], 4
      %s658 = int_to_ptr.vmem [resolvable:$true] %s657
      %663 = dma.vmem_to_hbm [thread:$0]  %s658, 512, %s6, [#allocation3], 128, 128, 8
    $region29: #{tpu_custom_call.1} parent=1 // pred_fallthru
      _
    // Predicated region
    $region30: #{tpu_custom_call.1} parent=1 // pred_check
      _
    $region31: #{tpu_custom_call.1} parent=1 // pred_check_branch
      %665 = sbr.rel (0) target = $region33
    $region32: #{tpu_custom_call.1} parent=1 // pred_region
      %666 = dma.done [#allocation3], 512
    $region33: #{tpu_custom_call.1} parent=1 // pred_fallthru
      _
    %667 = vsyncpa [#allocation3], 1

</llo_original>
